<compile_context>
chip_gen: v7x
topology: tpu7x:2x2x1
jax: 0.10.0
libtpu: 0.0.40
codegen_flags: <defaults>
</compile_context>

<pallas_src>
import functools

import jax
import jax.numpy as jnp
from jax.experimental import pallas as pl
from jax.experimental.pallas import tpu as pltpu


# ---------------------------------------------------------------------------
# Kernels
# ---------------------------------------------------------------------------

def se_kernel(x_ref, w1_ref, b1_ref, w2_ref, b2_ref, o_ref, *, inv_hw):
    """Single-pass SE: (Bt, C, HW) block -> pool -> 2 tiny matmuls -> scaled block."""
    # Squeeze: f32-accumulated global average pool over the lane-dense spatial axis.
    squeezed = jnp.sum(x_ref[...], axis=-1, dtype=jnp.float32) * inv_hw          # (Bt, C)

    # Excitation: Linear(C->Cr) + ReLU, Linear(Cr->C) + Sigmoid, all in f32.
    h = jnp.dot(squeezed, w1_ref[...], preferred_element_type=jnp.float32) + b1_ref[...]
    h = jnp.maximum(h, 0.0)                                                      # (Bt, Cr)
    s = jnp.dot(h, w2_ref[...], preferred_element_type=jnp.float32) + b2_ref[...]
    s = jax.nn.sigmoid(s)                                                        # (Bt, C)

    # Scale: multiply in f32, cast the product once (matches reference rounding for bf16 x).
    o_ref[...] = (x_ref[...].astype(jnp.float32) * s[:, :, None]).astype(o_ref.dtype)


def pool_kernel(x_ref, pooled_ref, *, inv_hw):
    """Two-pass fallback, pass 1: reduce one (1, Ct, HW) x block into row b of the
    channel-tile's (1, B, Ct) pooled block (resident across the inner batch grid axis)."""
    b = pl.program_id(1)
    s = jnp.sum(x_ref[...], axis=-1, dtype=jnp.float32) * inv_hw                 # (1, Ct)
    pooled_ref[0, pl.ds(b, 1), :] = s


def scale_kernel(x_ref, gate_ref, o_ref):
    """Two-pass fallback, pass 2: scale one (1, Ct, HW) x block by its gate row."""
    b = pl.program_id(1)
    g = gate_ref[0, pl.ds(b, 1), :]                                              # (1, Ct) f32
    o_ref[...] = (x_ref[...].astype(jnp.float32) * g[:, :, None]).astype(o_ref.dtype)


# ---------------------------------------------------------------------------
# Generation-aware tiling heuristics
# ---------------------------------------------------------------------------

def _tpu_hw_params():
    """VMEM block budget, vmem_limit_bytes and TensorCore count for the local chip.
    Any query failure falls back to v7x-safe conservative numbers (64 MiB, 1 core)."""
    vmem_cap = 64 * 1024 * 1024
    num_cores = 1
    try:
        info = pltpu.get_tpu_info()
        vmem_cap = int(getattr(info, "vmem_capacity_bytes", vmem_cap))
    except Exception:
        pass
    try:
        kind = str(getattr(jax.devices()[0], "device_kind", "")).lower()
        # v7x (and v4 / v5p megacore) chips expose 2 TensorCores per chip.
        if ("v7" in kind) or ("7x" in kind) or ("v4" in kind) or ("v5p" in kind):
            num_cores = 2
    except Exception:
        pass
    budget = max(16 * 1024 * 1024, int(vmem_cap * 0.45))
    vmem_limit = int(max(32 * 1024 * 1024,
                         min(vmem_cap - 8 * 1024 * 1024, int(vmem_cap * 0.85))))
    return budget, vmem_limit, num_cores


def _largest_divisor_leq(n, k):
    k = max(1, min(n, int(k)))
    while n % k:
        k -= 1
    return k


def _choose_batch_tile(B, C, HW, itemsize, budget_bytes, num_cores):
    """Pick Bt (a divisor of B) so double-buffered in+out blocks fit in budget_bytes.
    On 2-TensorCore chips prefer an even number of grid steps (balanced megacore split),
    but only when the resulting blocks stay >= ~2 MiB."""
    sublane = max(1, 32 // itemsize)                   # 8 for f32, 16 for bf16
    c_pad = ((C + sublane - 1) // sublane) * sublane   # VMEM sublane padding
    hw_pad = ((HW + 127) // 128) * 128                 # VMEM lane padding
    per_batch = 4 * c_pad * hw_pad * itemsize          # 2 in-buffers + 2 out-buffers
    bt = _largest_divisor_leq(B, max(1, budget_bytes // max(per_batch, 1)))
    if num_cores >= 2 and B >= 2:
        min_block_bytes = 2 * 1024 * 1024
        cand = bt
        while cand > 0 and (B // cand) % 2 != 0:
            cand = _largest_divisor_leq(B, cand - 1) if cand > 1 else 0
        if cand > 0 and (cand * per_batch) // 4 >= min_block_bytes:
            bt = cand
    return bt


def _choose_channel_tile(C, HW, itemsize, budget_bytes):
    """Channel tile for the two-pass fallback: a sublane-multiple divisor of C such that
    double-buffered (1, Ct, HW) in+out blocks fit in budget_bytes (else full C)."""
    sublane = max(1, 32 // itemsize)
    hw_pad = ((HW + 127) // 128) * 128
    per_chan = 4 * hw_pad * itemsize
    ct_max = max(1, budget_bytes // max(per_chan, 1))
    if ct_max >= C:
        return C
    k = (min(C, ct_max) // sublane) * sublane
    while k >= sublane:
        if C % k == 0:
            return k
        k -= sublane
    # TODO(synk): spatial tiling for huge-HW shapes with no usable channel divisor.
    return C


# ---------------------------------------------------------------------------
# Wrapper
# ---------------------------------------------------------------------------

def squeeze_excitation(x_nchw, w1, b1, w2, b2, *, donate_x=False,
                       force_two_pass=None, _budget_override=None):
    """x_nchw: (B, C, H, W). Weights follow the PyTorch Linear convention, pre-transposed:
    w1 (C, Cr), w2 (Cr, C); biases b1 (1, Cr), b2 (1, C), all f32."""
    B, C, H, W = x_nchw.shape
    HW = H * W
    Cr = w1.shape[1]
    dtype = x_nchw.dtype
    itemsize = jnp.dtype(dtype).itemsize
    inv_hw = 1.0 / HW

    budget, vmem_limit, num_cores = _tpu_hw_params()
    if _budget_override is not None:
        budget = int(_budget_override)

    sublane = max(1, 32 // itemsize)
    c_pad = ((C + sublane - 1) // sublane) * sublane
    hw_pad = ((HW + 127) // 128) * 128
    slab_bytes = c_pad * hw_pad * itemsize             # one (C, HW) block in VMEM

    two_pass = force_two_pass
    if two_pass is None:
        two_pass = (4 * slab_bytes > budget) or (
            B == 1 and slab_bytes >= 4 * 1024 * 1024 and C >= 2 * sublane)

    x = x_nchw.reshape(B, C, HW)                        # lane-dense spatial axis, no padding
    aliases = {0: 0} if donate_x else {}

    if not two_pass:
        # --- Single-pass path: whole (Bt, C, HW) slab per grid step. ---
        Bt = _choose_batch_tile(B, C, HW, itemsize, budget, num_cores)
        grid_len = B // Bt
        out = pl.pallas_call(
            functools.partial(se_kernel, inv_hw=inv_hw),
            out_shape=jax.ShapeDtypeStruct((B, C, HW), dtype),
            grid_spec=pltpu.PrefetchScalarGridSpec(
                num_scalar_prefetch=0,
                grid=(grid_len,),
                in_specs=[
                    pl.BlockSpec((Bt, C, HW), lambda i: (i, 0, 0)),   # x
                    pl.BlockSpec((C, Cr), lambda i: (0, 0)),          # w1 (VMEM-resident)
                    pl.BlockSpec((1, Cr), lambda i: (0, 0)),          # b1
                    pl.BlockSpec((Cr, C), lambda i: (0, 0)),          # w2
                    pl.BlockSpec((1, C), lambda i: (0, 0)),           # b2
                ],
                out_specs=pl.BlockSpec((Bt, C, HW), lambda i: (i, 0, 0)),
            ),
            input_output_aliases=aliases,
            compiler_params=pltpu.CompilerParams(
                dimension_semantics=("parallel",),
                vmem_limit_bytes=vmem_limit,
            ),
        )(x, w1, b1, w2, b2)
    else:
        # --- Two-pass fallback: channel-tiled reduce, tiny JAX excite, channel-tiled scale.
        ct = _choose_channel_tile(C, HW, itemsize, budget)
        n_ct = C // ct

        pooled3 = pl.pallas_call(
            functools.partial(pool_kernel, inv_hw=inv_hw),
            out_shape=jax.ShapeDtypeStruct((n_ct, B, ct), jnp.float32),
            grid_spec=pltpu.PrefetchScalarGridSpec(
                num_scalar_prefetch=0,
                grid=(n_ct, B),                                        # b is the fast axis
                in_specs=[pl.BlockSpec((1, ct, HW), lambda ci, b: (b, ci, 0))],
                out_specs=pl.BlockSpec((1, B, ct), lambda ci, b: (ci, 0, 0)),
            ),
            compiler_params=pltpu.CompilerParams(
                dimension_semantics=("parallel", "arbitrary"),
                vmem_limit_bytes=vmem_limit,
            ),
        )(x)

        pooled = pooled3.transpose(1, 0, 2).reshape(B, C)              # (B, C) f32
        h = jnp.maximum(pooled @ w1 + b1, 0.0)
        gate = jax.nn.sigmoid(h @ w2 + b2)                             # (B, C) f32
        gate3 = gate.reshape(B, n_ct, ct).transpose(1, 0, 2)           # (n_ct, B, ct)

        out = pl.pallas_call(
            scale_kernel,
            out_shape=jax.ShapeDtypeStruct((B, C, HW), dtype),
            grid_spec=pltpu.PrefetchScalarGridSpec(
                num_scalar_prefetch=0,
                grid=(n_ct, B),
                in_specs=[
                    pl.BlockSpec((1, ct, HW), lambda ci, b: (b, ci, 0)),   # x
                    pl.BlockSpec((1, B, ct), lambda ci, b: (ci, 0, 0)),    # gate (tiny)
                ],
                out_specs=pl.BlockSpec((1, ct, HW), lambda ci, b: (b, ci, 0)),
            ),
            input_output_aliases=aliases,
            compiler_params=pltpu.CompilerParams(
                dimension_semantics=("parallel", "parallel"),
                vmem_limit_bytes=vmem_limit,
            ),
        )(x, gate3)

    return out.reshape(B, C, H, W)


# ---------------------------------------------------------------------------
# Reference + test harness
# ---------------------------------------------------------------------------

def reference(x_nchw, w1, b1, w2, b2):
    squeezed = jnp.mean(x_nchw, axis=(2, 3))                 # (B, C)
    h = jnp.maximum(squeezed @ w1 + b1, 0.0)                 # (B, Cr)
    s = jax.nn.sigmoid(h @ w2 + b2)                          # (B, C)
    return x_nchw * s[:, :, None, None]


def _make_params(key, C, reduction_ratio):
    """Deterministic init matching nn.Linear(C, Cr) / nn.Linear(Cr, C), pre-transposed."""
    Cr = max(C // reduction_ratio, 1)
    k1, k2, k3, k4 = jax.random.split(key, 4)
    bound1 = 1.0 / (C ** 0.5)
    w1 = jax.random.uniform(k1, (C, Cr), jnp.float32, -bound1, bound1)
    b1 = jax.random.uniform(k2, (1, Cr), jnp.float32, -bound1, bound1)
    bound2 = 1.0 / (Cr ** 0.5)
    w2 = jax.random.uniform(k3, (Cr, C), jnp.float32, -bound2, bound2)
    b2 = jax.random.uniform(k4, (1, C), jnp.float32, -bound2, bound2)
    return w1, b1, w2, b2


if __name__ == "__main__":
    key = jax.random.PRNGKey(0)
    k_a, k_b, k_c, k_d, k_x1, k_x2, k_x3, k_x4 = jax.random.split(key, 8)

    # Case 1: module's nominal small shape (B=2, C=4, 16x16, reduction=16 -> Cr=1).
    x1 = jax.random.normal(k_x1, (2, 4, 16, 16), dtype=jnp.float32)
    p1 = _make_params(k_a, 4, 16)
    out1 = jax.block_until_ready(squeeze_excitation(x1, *p1))
    ref1 = reference(x1, *p1)
    assert out1.shape == x1.shape
    assert jnp.allclose(out1, ref1, atol=1e-5, rtol=1e-5), "mismatch vs reference (case 1)"

    # Case 2: non-128-multiple spatial (12x12=144, masked tail store) + aliased/donated x.
    x2 = jax.random.normal(k_x2, (8, 16, 12, 12), dtype=jnp.float32)
    p2 = _make_params(k_b, 16, 4)
    ref2 = reference(x2, *p2)                     # computed before donating x's buffer
    out2 = jax.block_until_ready(squeeze_excitation(x2, *p2, donate_x=True))
    assert out2.shape == ref2.shape
    assert jnp.allclose(out2, ref2, atol=1e-5, rtol=1e-5), "mismatch vs reference (case 2)"

    # Case 3: bf16 activations (multiply in f32, single rounding on the product).
    x3 = jax.random.normal(k_x3, (4, 8, 8, 8), dtype=jnp.bfloat16)
    p3 = _make_params(k_c, 8, 2)
    ref3 = reference(x3.astype(jnp.float32), *p3)
    out3 = jax.block_until_ready(squeeze_excitation(x3, *p3))
    assert out3.dtype == jnp.bfloat16
    assert jnp.allclose(out3.astype(jnp.float32), ref3, atol=1e-2, rtol=1e-2), \
        "mismatch vs reference (case 3)"

    # Case 4: force the two-pass channel-tiled fallback (tiny budget so Ct=8 < C=16).
    x4 = jax.random.normal(k_x4, (2, 16, 8, 8), dtype=jnp.float32)
    p4 = _make_params(k_d, 16, 4)
    out4 = jax.block_until_ready(
        squeeze_excitation(x4, *p4, force_two_pass=True, _budget_override=16 * 1024))
    ref4 = reference(x4, *p4)
    assert out4.shape == ref4.shape
    assert jnp.allclose(out4, ref4, atol=1e-5, rtol=1e-5), "mismatch vs reference (case 4)"

    print("KERNEL_OK")
</pallas_src>

<mosaic_0001>
module attributes {stable_mosaic.version = 11 : i64} {
  func.func @se_kernel(%arg0: i32, %arg1: memref<2x4x256xf32, #tpu.memory_space<vmem>>, %arg2: memref<4x1xf32, #tpu.memory_space<vmem>>, %arg3: memref<1x1xf32, #tpu.memory_space<vmem>>, %arg4: memref<1x4xf32, #tpu.memory_space<vmem>>, %arg5: memref<1x4xf32, #tpu.memory_space<vmem>>, %arg6: memref<2x4x256xf32, #tpu.memory_space<vmem>>) attributes {dimension_semantics = [#tpu.dimension_semantics<parallel>], iteration_bounds = array<i64: 1>, scalar_prefetch = 0 : i64, scratch_operands = 0 : i64, tpu.core_type = #tpu.core_type<tc>, window_params = [{transform_indices = @transform_0, window_bounds = array<i64: 2, 4, 256>}, {pipeline_mode = #tpu.pipeline_mode<synchronous>, transform_indices = @transform_1, window_bounds = array<i64: 4, 1>}, {pipeline_mode = #tpu.pipeline_mode<synchronous>, transform_indices = @transform_2, window_bounds = array<i64: 1, 1>}, {pipeline_mode = #tpu.pipeline_mode<synchronous>, transform_indices = @transform_3, window_bounds = array<i64: 1, 4>}, {pipeline_mode = #tpu.pipeline_mode<synchronous>, transform_indices = @transform_4, window_bounds = array<i64: 1, 4>}, {transform_indices = @transform_5, window_bounds = array<i64: 2, 4, 256>}]} {
    %c0 = arith.constant 0 : index
    %c0_0 = arith.constant 0 : index
    %c0_1 = arith.constant 0 : index
    %0 = vector.load %arg1[%c0, %c0_0, %c0_1] : memref<2x4x256xf32, #tpu.memory_space<vmem>>, vector<2x4x256xf32>
    %cst = arith.constant dense<0.000000e+00> : vector<2x4xf32>
    %1 = vector.multi_reduction <add>, %0, %cst [2] : vector<2x4x256xf32> to vector<2x4xf32>
    %cst_2 = arith.constant 3.906250e-03 : f32
    %2 = vector.broadcast %cst_2 : f32 to vector<2x4xf32>
    %3 = arith.mulf %1, %2 : vector<2x4xf32>
    %c0_3 = arith.constant 0 : index
    %c0_4 = arith.constant 0 : index
    %4 = vector.load %arg2[%c0_3, %c0_4] : memref<4x1xf32, #tpu.memory_space<vmem>>, vector<4x1xf32>
    %cst_5 = arith.constant dense<0.000000e+00> : vector<2x1xf32>
    %5 = tpu.matmul %3, %4, %cst_5 {dimension_numbers = #tpu.dot_dimension_numbers<[1], [0], [0], [1], [0, 0, 1, 1], [], []>} : vector<2x4xf32>, vector<4x1xf32>, vector<2x1xf32> -> vector<2x1xf32>
    %c0_6 = arith.constant 0 : index
    %c0_7 = arith.constant 0 : index
    %6 = vector.load %arg3[%c0_6, %c0_7] : memref<1x1xf32, #tpu.memory_space<vmem>>, vector<1x1xf32>
    %7 = vector.broadcast %6 : vector<1x1xf32> to vector<2x1xf32>
    %8 = arith.addf %5, %7 : vector<2x1xf32>
    %cst_8 = arith.constant 0.000000e+00 : f32
    %9 = vector.broadcast %cst_8 : f32 to vector<2x1xf32>
    %10 = arith.maximumf %8, %9 : vector<2x1xf32>
    %c0_9 = arith.constant 0 : index
    %c0_10 = arith.constant 0 : index
    %11 = vector.load %arg4[%c0_9, %c0_10] : memref<1x4xf32, #tpu.memory_space<vmem>>, vector<1x4xf32>
    %cst_11 = arith.constant dense<0.000000e+00> : vector<2x4xf32>
    %12 = tpu.matmul %10, %11, %cst_11 {dimension_numbers = #tpu.dot_dimension_numbers<[1], [0], [0], [1], [0, 0, 1, 1], [], []>} : vector<2x1xf32>, vector<1x4xf32>, vector<2x4xf32> -> vector<2x4xf32>
    %c0_12 = arith.constant 0 : index
    %c0_13 = arith.constant 0 : index
    %13 = vector.load %arg5[%c0_12, %c0_13] : memref<1x4xf32, #tpu.memory_space<vmem>>, vector<1x4xf32>
    %14 = vector.broadcast %13 : vector<1x4xf32> to vector<2x4xf32>
    %15 = arith.addf %12, %14 : vector<2x4xf32>
    %16 = arith.negf %15 : vector<2x4xf32>
    %17 = math.exp %16 : vector<2x4xf32>
    %cst_14 = arith.constant 1.000000e+00 : f32
    %18 = vector.broadcast %cst_14 : f32 to vector<2x4xf32>
    %19 = arith.addf %18, %17 : vector<2x4xf32>
    %20 = arith.divf %18, %19 : vector<2x4xf32>
    %c0_15 = arith.constant 0 : index
    %c0_16 = arith.constant 0 : index
    %c0_17 = arith.constant 0 : index
    %21 = vector.load %arg1[%c0_15, %c0_16, %c0_17] : memref<2x4x256xf32, #tpu.memory_space<vmem>>, vector<2x4x256xf32>
    %22 = vector.shape_cast %20 : vector<2x4xf32> to vector<2x4x1xf32>
    %23 = vector.broadcast %22 : vector<2x4x1xf32> to vector<2x4x256xf32>
    %24 = arith.mulf %21, %23 : vector<2x4x256xf32>
    %c0_18 = arith.constant 0 : index
    %c0_19 = arith.constant 0 : index
    %c0_20 = arith.constant 0 : index
    %25 = vector.load %arg6[%c0_18, %c0_19, %c0_20] : memref<2x4x256xf32, #tpu.memory_space<vmem>>, vector<2x4x256xf32>
    tpu.vector_store %arg6[%c0_18, %c0_19, %c0_20], %24 {strides = array<i32>} : memref<2x4x256xf32, #tpu.memory_space<vmem>>, vector<2x4x256xf32>,
    return
  }
  func.func @transform_0(%arg0: i32) -> (i32, i32, i32) {
    %c0_i32 = arith.constant 0 : i32
    %c0_i32_0 = arith.constant 0 : i32
    %c0_i32_1 = arith.constant 0 : i32
    return %arg0, %c0_i32, %c0_i32_0 : i32, i32, i32
  }
  func.func @transform_1(%arg0: i32) -> (i32, i32) {
    %c0_i32 = arith.constant 0 : i32
    %c0_i32_0 = arith.constant 0 : i32
    %c0_i32_1 = arith.constant 0 : i32
    return %c0_i32, %c0_i32_0 : i32, i32
  }
  func.func @transform_2(%arg0: i32) -> (i32, i32) {
    %c0_i32 = arith.constant 0 : i32
    %c0_i32_0 = arith.constant 0 : i32
    %c0_i32_1 = arith.constant 0 : i32
    return %c0_i32, %c0_i32_0 : i32, i32
  }
  func.func @transform_3(%arg0: i32) -> (i32, i32) {
    %c0_i32 = arith.constant 0 : i32
    %c0_i32_0 = arith.constant 0 : i32
    %c0_i32_1 = arith.constant 0 : i32
    return %c0_i32, %c0_i32_0 : i32, i32
  }
  func.func @transform_4(%arg0: i32) -> (i32, i32) {
    %c0_i32 = arith.constant 0 : i32
    %c0_i32_0 = arith.constant 0 : i32
    %c0_i32_1 = arith.constant 0 : i32
    return %c0_i32, %c0_i32_0 : i32, i32
  }
  func.func @transform_5(%arg0: i32) -> (i32, i32, i32) {
    %c0_i32 = arith.constant 0 : i32
    %c0_i32_0 = arith.constant 0 : i32
    %c0_i32_1 = arith.constant 0 : i32
    return %arg0, %c0_i32, %c0_i32_0 : i32, i32, i32
  }
}

</mosaic_0001>

<llo_original>
// kernel: tpu_custom_call.1
$region0: #{tpu_custom_call.1}
  #allocation0 [shape = 'u32[]', space=smem, size = 0x4, offset = 0x4, fixed_abs, tag = 'smem constant byte address 0x4 - core index']
  #allocation1 [shape = 'u32[144,128]{1,0:T(1,128)}', space=vmem, size = 0x12000, scoped, tag = 'internal scratch']
  #allocation2 [shape = 'f32[1,1]{1,0:T(1,128)S(1)}', space=vmem, size = 0x200, scoped, tag = 'scoped memory for tpu_custom_call.1']
  %s0 = inlined_call_operand.hbm [shape: f32[2,4,256], index: 0, kind: input, shape index: {}]
  %s1 = inlined_call_operand.vmem [shape: f32[4,1], index: 1, kind: input, shape index: {}]
  %s2 = inlined_call_operand.<no memory space> [shape: f32[1,1], index: 2, kind: input, shape index: {}]
  %s3 = inlined_call_operand.vmem [shape: f32[1,4], index: 3, kind: input, shape index: {}]
  %s4 = inlined_call_operand.vmem [shape: f32[1,4], index: 4, kind: input, shape index: {}]
  %s5 = inlined_call_operand.hbm [shape: f32[2,4,256], index: 5, kind: output, shape index: {}]
  %s6 = sld [smem:[#allocation0]]
  $region34: #{tpu_custom_call.1} parent=0
    _
  %s8 = ssub.s32 1, %s6
  %s9 = scalar_select 0, %s8, %s6
  %v10 = vstv %s2
  %11 = vst [vmem:[#allocation2] sm:$0x1] %v10
  $region1: #{tpu_custom_call.1} parent=0
    #allocation3 [shape = 'u8[8192]{0}', space=vmem, size = 0x2000, scoped, tag = 'input window, operand 0, single buffered']
    #allocation4 [shape = 's32[1]{0}', space=sflag, size = 0x4, scoped, tag = 'scoped memory for tpu_custom_call.1']
    #allocation5 [shape = 's32[1]{0}', space=sflag, size = 0x4, scoped, tag = 'scoped memory for tpu_custom_call.1']
    #allocation6 [shape = 'u8[8192]{0}', space=vmem, size = 0x2000, scoped, tag = 'output window, operand 0, single buffered']
    %12 = vsyncpa [#allocation4], 0
    %13 = vsyncpa [#allocation5], 0
    // Predicated region
    $region2: #{tpu_custom_call.1} parent=1 // pred_check
      _
    $region3: #{tpu_custom_call.1} parent=1 // pred_check_branch
      %15 = sbr.rel (0) target = $region5
    $region4: #{tpu_custom_call.1} parent=1 // pred_region
      %s17 = ssub.s32 256, 256
      %18 = vsyncadd [#allocation4], %s17
      %s19 = sshll.u32 [#allocation3], 4
      %s20 = int_to_ptr.vmem [resolvable:$true] %s19
      %25 = dma.hbm_to_vmem [thread:$0]  %s0, 256, %s20, [#allocation4], 128, 128, 8
    $region5: #{tpu_custom_call.1} parent=1 // pred_fallthru
      _
    // Predicated region
    $region6: #{tpu_custom_call.1} parent=1 // pred_check
      _
    $region7: #{tpu_custom_call.1} parent=1 // pred_check_branch
      %27 = sbr.rel (0) target = $region9
    $region8: #{tpu_custom_call.1} parent=1 // pred_region
      _
    $region9: #{tpu_custom_call.1} parent=1 // pred_fallthru
      _
    // Predicated region
    $region10: #{tpu_custom_call.1} parent=1 // pred_check
      _
    $region11: #{tpu_custom_call.1} parent=1 // pred_check_branch
      %29 = sbr.rel (0) target = $region13
    $region12: #{tpu_custom_call.1} parent=1 // pred_region
      _
    $region13: #{tpu_custom_call.1} parent=1 // pred_fallthru
      _
    // Predicated region
    $region14: #{tpu_custom_call.1} parent=1 // pred_check
      _
    $region15: #{tpu_custom_call.1} parent=1 // pred_check_branch
      %31 = sbr.rel (0) target = $region17
    $region16: #{tpu_custom_call.1} parent=1 // pred_region
      _
    $region17: #{tpu_custom_call.1} parent=1 // pred_fallthru
      _
    // Predicated region
    $region18: #{tpu_custom_call.1} parent=1 // pred_check
      _
    $region19: #{tpu_custom_call.1} parent=1 // pred_check_branch
      %33 = sbr.rel (0) target = $region21
    $region20: #{tpu_custom_call.1} parent=1 // pred_region
      _
    $region21: #{tpu_custom_call.1} parent=1 // pred_fallthru
      _
    // Predicated region
    $region22: #{tpu_custom_call.1} parent=1 // pred_check
      _
    $region23: #{tpu_custom_call.1} parent=1 // pred_check_branch
      %35 = sbr.rel (0) target = $region25
    $region24: #{tpu_custom_call.1} parent=1 // pred_region
      %36 = dma.done [#allocation4], 256
    $region25: #{tpu_custom_call.1} parent=1 // pred_fallthru
      _
    %v37 = vld [vmem:[#allocation3] sm:$0xff]
    %v38 = vld [vmem:[#allocation3 + $0x8] sm:$0xff]
    %v41 = vcombine.high %v37, %v37
    %v42 = vcombine.high %v38, %v38
    %vm45 = vcmask 1043456
    %v46 = vsel %vm45, %v37, 0.0
    %v47 = vsel %vm45, %v41, 0.0
    %v48 = vadd.f32 %v46, %v47
    %49 = vadd.xlane.f32.xlu0 %v48
    %v50 = vpop.xlane.xlu0 %49
    %v51 = vsel %vm45, %v38, 0.0
    %v52 = vsel %vm45, %v42, 0.0
    %v53 = vadd.f32 %v51, %v52
    %54 = vadd.xlane.f32.xlu0 %v53
    %v55 = vpop.xlane.xlu0 %54
    %v56 = vmul.f32 %v50, 0.00390625
    %v57 = vmul.f32 %v55, 0.00390625
    %v58 = vld [vmem:[%s1] sm:$0xf]
    %v59 = vld [vmem:[#allocation2] sm:$0x1]
    %v61 = vlaneseq
    %v62 = vshrl.u32 %v61, 7
    %v63 = vsub.s32 0, %v62
    %v64 = vrot.slane %v59, %v63
    %v68 = vlaneseq
    %v69 = vand.u32 %v68, 127
    %v70 = vlaneseq
    %v71 = vshrl.u32 %v70, 7
    %v72 = vsub.s32 %v69, %v71
    %v73 = vrot.slane %v56, %v72
    %v74 = vlaneseq
    %v75 = vshrl.u32 %v74, 7
    %v76 = vsub.s32 %v69, %v75
    %v77 = vrot.slane %v57, %v76
    %vm78 = vcmask 1041409
    %v79 = vsel %vm78, %v77, %v73
    %vm80 = vcmask 31744
    %v81 = vsel %vm80, %v79, 0
    %v84 = vsel %vm45, %v58, 0
    %86 = vmatprep.subr.mxu0 0.0
    %87 = vmatpush1.msra.mxu0 %v84
    %88 = vmatprep.subr.mxu0 0.0
    %89 = vmatpush1.msra.mxu0 0.0
    %90 = vmatprep.subr.mxu0 0.0
    %91 = vmatpush1.msra.mxu0 0.0
    %92 = vmatprep.subr.mxu0 0.0
    %93 = vmatpush1.msra.mxu0 0.0
    %94 = vmatprep.subr.mxu0 0.0
    %95 = vmatpush1.msra.mxu0 0.0
    %96 = vmatprep.subr.mxu0 0.0
    %97 = vmatpush1.msra.mxu0 0.0
    %98 = vmatprep.subr.mxu0 0.0
    %99 = vmatpush1.msra.mxu0 0.0
    %100 = vmatprep.subr.mxu0 0.0
    %101 = vmatpush1.msra.mxu0 0.0
    %102 = vmatprep.subr.mxu0 0.0
    %103 = vmatpush1.msra.mxu0 0.0
    %104 = vmatprep.subr.mxu0 0.0
    %105 = vmatpush1.msra.mxu0 0.0
    %106 = vmatprep.subr.mxu0 0.0
    %107 = vmatpush1.msra.mxu0 0.0
    %108 = vmatprep.subr.mxu0 0.0
    %109 = vmatpush1.msra.mxu0 0.0
    %110 = vmatprep.subr.mxu0 0.0
    %111 = vmatpush1.msra.mxu0 0.0
    %112 = vmatprep.subr.mxu0 0.0
    %113 = vmatpush1.msra.mxu0 0.0
    %114 = vmatprep.subr.mxu0 0.0
    %115 = vmatpush1.msra.mxu0 0.0
    %116 = vmatprep.subr.mxu0 0.0
    %117 = vmatpush1.msra.mxu0 0.0
    %118 = vmatprep.subr.mxu0 0.0
    %119 = vmatpush1.msra.mxu0 0.0
    %120 = vmatprep.subr.mxu0 0.0
    %121 = vmatpush1.msra.mxu0 0.0
    %122 = vmatprep.subr.mxu0 0.0
    %123 = vmatpush1.msra.mxu0 0.0
    %124 = vmatprep.subr.mxu0 0.0
    %125 = vmatpush1.msra.mxu0 0.0
    %126 = vmatprep.subr.mxu0 0.0
    %127 = vmatpush1.msra.mxu0 0.0
    %128 = vmatprep.subr.mxu0 0.0
    %129 = vmatpush1.msra.mxu0 0.0
    %130 = vmatprep.subr.mxu0 0.0
    %131 = vmatpush1.msra.mxu0 0.0
    %132 = vmatprep.subr.mxu0 0.0
    %133 = vmatpush1.msra.mxu0 0.0
    %134 = vmatprep.subr.mxu0 0.0
    %135 = vmatpush1.msra.mxu0 0.0
    %136 = vmatprep.subr.mxu0 0.0
    %137 = vmatpush1.msra.mxu0 0.0
    %138 = vmatprep.subr.mxu0 0.0
    %139 = vmatpush1.msra.mxu0 0.0
    %140 = vmatprep.subr.mxu0 0.0
    %141 = vmatpush1.msra.mxu0 0.0
    %142 = vmatprep.subr.mxu0 0.0
    %143 = vmatpush1.msra.mxu0 0.0
    %144 = vmatprep.subr.mxu0 0.0
    %145 = vmatpush1.msra.mxu0 0.0
    %146 = vmatprep.subr.mxu0 0.0
    %147 = vmatpush1.msra.mxu0 0.0
    %148 = vmatprep.subr.mxu0 0.0
    %149 = vmatpush1.msra.mxu0 0.0
    %150 = vmatprep.mubr.f32.mxu0 0.0
    %151 = vmatmul.mubr.f32.gmra.mrb[0].mxu0 %v81
    %v152 = vpop.f32.mrb[0].mxu0
    %v153 = vadd.f32 %v64, %v152
    %v154 = vpop.f32.mrb[0].mxu0
    %155 = vdwg.mxu0
    %v156 = vmax.f32 %v153, 0.0
    %v157 = vld [vmem:[%s3] sm:$0x1]
    %v158 = vld [vmem:[%s4] sm:$0x1]
    %v160 = vlaneseq
    %v161 = vshrl.u32 %v160, 7
    %v162 = vsub.s32 0, %v161
    %v163 = vrot.slane %v158, %v162
    %vm165 = vcmask 7168
    %v167 = vsel %vm165, %v156, 0
    %vm169 = vcmask 1040384
    %v171 = vsel %vm169, %v157, 0
    %173 = vmatprep.subr.mxu0 0.0
    %174 = vmatpush1.msra.mxu0 %v171
    %175 = vmatprep.subr.mxu0 0.0
    %176 = vmatpush1.msra.mxu0 0.0
    %177 = vmatprep.subr.mxu0 0.0
    %178 = vmatpush1.msra.mxu0 0.0
    %179 = vmatprep.subr.mxu0 0.0
    %180 = vmatpush1.msra.mxu0 0.0
    %181 = vmatprep.subr.mxu0 0.0
    %182 = vmatpush1.msra.mxu0 0.0
    %183 = vmatprep.subr.mxu0 0.0
    %184 = vmatpush1.msra.mxu0 0.0
    %185 = vmatprep.subr.mxu0 0.0
    %186 = vmatpush1.msra.mxu0 0.0
    %187 = vmatprep.subr.mxu0 0.0
    %188 = vmatpush1.msra.mxu0 0.0
    %189 = vmatprep.subr.mxu0 0.0
    %190 = vmatpush1.msra.mxu0 0.0
    %191 = vmatprep.subr.mxu0 0.0
    %192 = vmatpush1.msra.mxu0 0.0
    %193 = vmatprep.subr.mxu0 0.0
    %194 = vmatpush1.msra.mxu0 0.0
    %195 = vmatprep.subr.mxu0 0.0
    %196 = vmatpush1.msra.mxu0 0.0
    %197 = vmatprep.subr.mxu0 0.0
    %198 = vmatpush1.msra.mxu0 0.0
    %199 = vmatprep.subr.mxu0 0.0
    %200 = vmatpush1.msra.mxu0 0.0
    %201 = vmatprep.subr.mxu0 0.0
    %202 = vmatpush1.msra.mxu0 0.0
    %203 = vmatprep.subr.mxu0 0.0
    %204 = vmatpush1.msra.mxu0 0.0
    %205 = vmatprep.subr.mxu0 0.0
    %206 = vmatpush1.msra.mxu0 0.0
    %207 = vmatprep.subr.mxu0 0.0
    %208 = vmatpush1.msra.mxu0 0.0
    %209 = vmatprep.subr.mxu0 0.0
    %210 = vmatpush1.msra.mxu0 0.0
    %211 = vmatprep.subr.mxu0 0.0
    %212 = vmatpush1.msra.mxu0 0.0
    %213 = vmatprep.subr.mxu0 0.0
    %214 = vmatpush1.msra.mxu0 0.0
    %215 = vmatprep.subr.mxu0 0.0
    %216 = vmatpush1.msra.mxu0 0.0
    %217 = vmatprep.subr.mxu0 0.0
    %218 = vmatpush1.msra.mxu0 0.0
    %219 = vmatprep.subr.mxu0 0.0
    %220 = vmatpush1.msra.mxu0 0.0
    %221 = vmatprep.subr.mxu0 0.0
    %222 = vmatpush1.msra.mxu0 0.0
    %223 = vmatprep.subr.mxu0 0.0
    %224 = vmatpush1.msra.mxu0 0.0
    %225 = vmatprep.subr.mxu0 0.0
    %226 = vmatpush1.msra.mxu0 0.0
    %227 = vmatprep.subr.mxu0 0.0
    %228 = vmatpush1.msra.mxu0 0.0
    %229 = vmatprep.subr.mxu0 0.0
    %230 = vmatpush1.msra.mxu0 0.0
    %231 = vmatprep.subr.mxu0 0.0
    %232 = vmatpush1.msra.mxu0 0.0
    %233 = vmatprep.subr.mxu0 0.0
    %234 = vmatpush1.msra.mxu0 0.0
    %235 = vmatprep.subr.mxu0 0.0
    %236 = vmatpush1.msra.mxu0 0.0
    %237 = vmatprep.mubr.f32.mxu0 0.0
    %238 = vmatmul.mubr.f32.gmra.mrb[0].mxu0 %v167
    %v239 = vpop.f32.mrb[0].mxu0
    %v240 = vadd.f32 %v163, %v239
    %v241 = vpop.f32.mrb[0].mxu0
    %242 = vdwg.mxu0
    %v243 = vxor.u32 %v240, 2147483648
    %v244 = vmul.f32 %v243, 1.442695
    %v245 = vpow.pop %v244
    %v246 = vadd.f32 %v245, 1.0
    %v247 = vrcp.pop %v246
    %v248 = vmul.f32 1.0, %v247
    %v249 = vlaneseq
    %v250 = vshrl.u32 %v249, 7
    %v251 = vsub.s32 0, %v250
    %v252 = vrot.slane %v248, %v251
    %254 = vbcast.lane.b32.xlu0 %v252, 256
    %v255 = vpop.permute.xlu0 %254
    %v256 = vlaneseq
    %v257 = vshrl.u32 %v256, 7
    %v258 = vsub.s32 1, %v257
    %v259 = vrot.slane %v248, %v258
    %261 = vbcast.lane.b32.xlu0 %v259, 256
    %v262 = vpop.permute.xlu0 %261
    %v266 = vunpack.c.l.s4 839922192
    %v267 = vunpack.c.0.s8 %v266
    %v268 = vlaneseq
    %v269 = vshrl.u32 %v268, 7
    %v270 = vsub.s32 %v267, %v269
    %v271 = vrot.slane %v255, %v270
    %v273 = vunpack.c.l.s4 839922192
    %v274 = vunpack.c.0.s8 %v273
    %v275 = vlaneseq
    %v276 = vshrl.u32 %v275, 7
    %v277 = vsub.s32 %v274, %v276
    %v278 = vrot.slane %v262, %v277
    %v281 = vmul.f32 %v37, %v271
    %v282 = vmul.f32 %v38, %v278
    %283 = vst [vmem:[#allocation6] sm:$0xff] %v281
    %284 = vst [vmem:[#allocation6 + $0x8] sm:$0xff] %v282
    // Predicated region
    $region26: #{tpu_custom_call.1} parent=1 // pred_check
      _
    $region27: #{tpu_custom_call.1} parent=1 // pred_check_branch
      %286 = sbr.rel (0) target = $region29
    $region28: #{tpu_custom_call.1} parent=1 // pred_region
      %s288 = ssub.s32 256, 256
      %289 = vsyncadd [#allocation5], %s288
      %s290 = sshll.u32 [#allocation6], 4
      %s291 = int_to_ptr.vmem [resolvable:$true] %s290
      %296 = dma.vmem_to_hbm [thread:$0]  %s291, 256, %s5, [#allocation5], 128, 128, 8
    $region29: #{tpu_custom_call.1} parent=1 // pred_fallthru
      _
    // Predicated region
    $region30: #{tpu_custom_call.1} parent=1 // pred_check
      _
    $region31: #{tpu_custom_call.1} parent=1 // pred_check_branch
      %298 = sbr.rel (0) target = $region33
    $region32: #{tpu_custom_call.1} parent=1 // pred_region
      %299 = dma.done [#allocation5], 256
    $region33: #{tpu_custom_call.1} parent=1 // pred_fallthru
      _
    %300 = vsyncpa [#allocation4], 1
    %301 = vsyncpa [#allocation5], 1

</llo_original>
